<compile_context>
chip_gen: v6e
topology: v6e:2x2x1
jax: 0.10.0
libtpu: 0.0.40
codegen_flags: <defaults>
</compile_context>

<pallas_src>
import jax
import jax.numpy as jnp
from jax.experimental import pallas as pl
from jax.experimental.pallas import tpu as pltpu


def _mlp_proj_kernel(x_ref, w_ref, b_ref, o_ref, acc_ref):
    # x_ref:  (tm, tk)  activations tile (bf16)
    # w_ref:  (tk, tn)  W^T tile         (bf16)
    # b_ref:  (1,  tn)  bias             (f32)
    # o_ref:  (tm, tn)  output tile      (f32), lane-dense (tn % 128 == 0)
    # acc_ref:(tm, tn)  f32 VMEM accumulator, persistent across the K axis
    @pl.when(pl.program_id(2) == 0)
    def _():
        acc_ref[...] = jnp.zeros_like(acc_ref)

    acc_ref[...] += jnp.dot(x_ref[...], w_ref[...],
                            preferred_element_type=jnp.float32)

    @pl.when(pl.program_id(2) == pl.num_programs(2) - 1)
    def _():
        o_ref[...] = (acc_ref[...] + b_ref[...]).astype(o_ref.dtype)


def _pick_tile(dim, preferred):
    for t in preferred:
        if dim % t == 0:
            return t
    return dim  # fall back to the full (untiled) dimension


def mlp_forward(x_nchw, weight, bias, *, compute_dtype=jnp.bfloat16):
    """MLP.forward: (x.flatten(2).transpose(1,2)) @ weight.T + bias.

    x_nchw: (B, C, H, W); weight: (E, C) (PyTorch nn.Linear layout); bias: (E,)
    Returns (B, H*W, E) float32.
    """
    B, C, H, W = x_nchw.shape
    E, C_w = weight.shape
    assert C == C_w
    HW = H * W
    M = B * HW

    # flatten(2).transpose(1,2), then fold batch into the matmul M dimension.
    x2d = x_nchw.reshape(B, C, HW).transpose(0, 2, 1).reshape(M, C)
    x2d = x2d.astype(compute_dtype)                 # bf16 MXU inputs
    w_t = weight.T.astype(compute_dtype)            # (C, E), bf16
    b2 = bias.reshape(1, E).astype(jnp.float32)     # f32 bias

    # Prefer 256-row M tiles so M=512 splits into 2 parallel tiles (v7x 2 TCs);
    # tn a multiple of 128 keeps the output lane-dense.
    tm = _pick_tile(M, (256, 128, 64, 32, 16, 8))
    tn = _pick_tile(E, (256, 128))
    tk = _pick_tile(C, (512, 256, 128, 64, 32, 16, 8))
    grid = (M // tm, E // tn, C // tk)

    out2d = pl.pallas_call(
        _mlp_proj_kernel,
        out_shape=jax.ShapeDtypeStruct((M, E), jnp.float32),
        grid_spec=pltpu.PrefetchScalarGridSpec(
            num_scalar_prefetch=0,
            grid=grid,
            in_specs=[
                pl.BlockSpec((tm, tk), lambda i, j, k: (i, k)),
                pl.BlockSpec((tk, tn), lambda i, j, k: (k, j)),
                pl.BlockSpec((1, tn), lambda i, j, k: (0, j)),
            ],
            out_specs=pl.BlockSpec((tm, tn), lambda i, j, k: (i, j)),
            scratch_shapes=[pltpu.VMEM((tm, tn), jnp.float32)],
        ),
        compiler_params=pltpu.CompilerParams(
            dimension_semantics=("parallel", "parallel", "arbitrary")),
    )(x2d, w_t, b2)

    return out2d.reshape(B, HW, E)


def _reference(x_nchw, weight, bias, *, compute_dtype=jnp.bfloat16):
    """Pure-JAX reference with the same bf16 input cast (f32 accumulation)."""
    B, C, H, W = x_nchw.shape
    xf = x_nchw.reshape(B, C, H * W).transpose(0, 2, 1)
    xc = xf.astype(compute_dtype).astype(jnp.float32)
    wc = weight.astype(compute_dtype).astype(jnp.float32)
    return jnp.einsum("bmc,ec->bme", xc, wc) + bias[None, None, :].astype(jnp.float32)


if __name__ == "__main__":
    # MLP(input_dim=64, embed_dim=128) on a (2, 64, 16, 16) feature map.
    B, IN_DIM, H, W = 2, 64, 16, 16
    EMBED_DIM = 128

    key = jax.random.PRNGKey(0)
    kx, kw, kb = jax.random.split(key, 3)
    x = jax.random.normal(kx, (B, IN_DIM, H, W), dtype=jnp.float32)

    # Deterministic PyTorch-style uniform init for nn.Linear.
    bound = 1.0 / (IN_DIM ** 0.5)
    weight = jax.random.uniform(kw, (EMBED_DIM, IN_DIM),
                                minval=-bound, maxval=bound, dtype=jnp.float32)
    bias = jax.random.uniform(kb, (EMBED_DIM,),
                              minval=-bound, maxval=bound, dtype=jnp.float32)

    out = mlp_forward(x, weight, bias)
    out = jax.block_until_ready(out)

    ref = _reference(x, weight, bias)
    assert out.shape == (B, H * W, EMBED_DIM), out.shape
    max_err = float(jnp.max(jnp.abs(out - ref)))
    assert jnp.allclose(out, ref, atol=1e-3, rtol=1e-3), max_err

    print("KERNEL_OK")
</pallas_src>

<mosaic_0001>
module attributes {stable_mosaic.version = 11 : i64} {
  func.func @_mlp_proj_kernel(%arg0: i32, %arg1: i32, %arg2: i32, %arg3: memref<256x64xbf16, #tpu.memory_space<vmem>>, %arg4: memref<64x128xbf16, #tpu.memory_space<vmem>>, %arg5: memref<1x128xf32, #tpu.memory_space<vmem>>, %arg6: memref<256x128xf32, #tpu.memory_space<vmem>>, %arg7: memref<256x128xf32, #tpu.memory_space<vmem>>) attributes {dimension_semantics = [#tpu.dimension_semantics<parallel>, #tpu.dimension_semantics<parallel>, #tpu.dimension_semantics<arbitrary>], iteration_bounds = array<i64: 2, 1, 1>, scalar_prefetch = 0 : i64, scratch_operands = 1 : i64, tpu.core_type = #tpu.core_type<tc>, window_params = [{transform_indices = @transform_0, window_bounds = array<i64: 256, 64>}, {transform_indices = @transform_1, window_bounds = array<i64: 64, 128>}, {transform_indices = @transform_2, window_bounds = array<i64: 1, 128>}, {transform_indices = @transform_3, window_bounds = array<i64: 256, 128>}]} {
    %c0_i32 = arith.constant 0 : i32
    %0 = arith.cmpi eq, %arg2, %c0_i32 : i32
    %1 = arith.extui %0 : i1 to i32
    %c0_i32_0 = arith.constant 0 : i32
    %2 = arith.cmpi ne, %1, %c0_i32_0 : i32
    scf.if %2 {
      %cst_10 = arith.constant 0.000000e+00 : f32
      %12 = vector.broadcast %cst_10 : f32 to vector<256x128xf32>
      %c0_11 = arith.constant 0 : index
      %c0_12 = arith.constant 0 : index
      %13 = vector.load %arg7[%c0_11, %c0_12] : memref<256x128xf32, #tpu.memory_space<vmem>>, vector<256x128xf32>
      tpu.vector_store %arg7[%c0_11, %c0_12], %12 {strides = array<i32>} : memref<256x128xf32, #tpu.memory_space<vmem>>, vector<256x128xf32>,
    } else {
    }
    %c0 = arith.constant 0 : index
    %c0_1 = arith.constant 0 : index
    %3 = vector.load %arg7[%c0, %c0_1] : memref<256x128xf32, #tpu.memory_space<vmem>>, vector<256x128xf32>
    %c0_2 = arith.constant 0 : index
    %c0_3 = arith.constant 0 : index
    %4 = vector.load %arg3[%c0_2, %c0_3] : memref<256x64xbf16, #tpu.memory_space<vmem>>, vector<256x64xbf16>
    %c0_4 = arith.constant 0 : index
    %c0_5 = arith.constant 0 : index
    %5 = vector.load %arg4[%c0_4, %c0_5] : memref<64x128xbf16, #tpu.memory_space<vmem>>, vector<64x128xbf16>
    %cst = arith.constant dense<0.000000e+00> : vector<256x128xf32>
    %6 = tpu.matmul %4, %5, %cst {dimension_numbers = #tpu.dot_dimension_numbers<[1], [0], [0], [1], [0, 0, 1, 1], [], []>} : vector<256x64xbf16>, vector<64x128xbf16>, vector<256x128xf32> -> vector<256x128xf32>
    %7 = arith.addf %3, %6 : vector<256x128xf32>
    %c0_6 = arith.constant 0 : index
    %c0_7 = arith.constant 0 : index
    %8 = vector.load %arg7[%c0_6, %c0_7] : memref<256x128xf32, #tpu.memory_space<vmem>>, vector<256x128xf32>
    tpu.vector_store %arg7[%c0_6, %c0_7], %7 {strides = array<i32>} : memref<256x128xf32, #tpu.memory_space<vmem>>, vector<256x128xf32>,
    %c0_i32_8 = arith.constant 0 : i32
    %9 = arith.cmpi eq, %arg2, %c0_i32_8 : i32
    %10 = arith.extui %9 : i1 to i32
    %c0_i32_9 = arith.constant 0 : i32
    %11 = arith.cmpi ne, %10, %c0_i32_9 : i32
    scf.if %11 {
      %c0_10 = arith.constant 0 : index
      %c0_11 = arith.constant 0 : index
      %12 = vector.load %arg7[%c0_10, %c0_11] : memref<256x128xf32, #tpu.memory_space<vmem>>, vector<256x128xf32>
      %c0_12 = arith.constant 0 : index
      %c0_13 = arith.constant 0 : index
      %13 = vector.load %arg5[%c0_12, %c0_13] : memref<1x128xf32, #tpu.memory_space<vmem>>, vector<1x128xf32>
      %14 = vector.broadcast %13 : vector<1x128xf32> to vector<256x128xf32>
      %15 = arith.addf %12, %14 : vector<256x128xf32>
      %c0_14 = arith.constant 0 : index
      %c0_15 = arith.constant 0 : index
      %16 = vector.load %arg6[%c0_14, %c0_15] : memref<256x128xf32, #tpu.memory_space<vmem>>, vector<256x128xf32>
      tpu.vector_store %arg6[%c0_14, %c0_15], %15 {strides = array<i32>} : memref<256x128xf32, #tpu.memory_space<vmem>>, vector<256x128xf32>,
    } else {
    }
    return
  }
  func.func @transform_0(%arg0: i32, %arg1: i32, %arg2: i32) -> (i32, i32) {
    %c0_i32 = arith.constant 0 : i32
    return %arg0, %arg2 : i32, i32
  }
  func.func @transform_1(%arg0: i32, %arg1: i32, %arg2: i32) -> (i32, i32) {
    %c0_i32 = arith.constant 0 : i32
    return %arg2, %arg1 : i32, i32
  }
  func.func @transform_2(%arg0: i32, %arg1: i32, %arg2: i32) -> (i32, i32) {
    %c0_i32 = arith.constant 0 : i32
    %c0_i32_0 = arith.constant 0 : i32
    return %c0_i32, %arg1 : i32, i32
  }
  func.func @transform_3(%arg0: i32, %arg1: i32, %arg2: i32) -> (i32, i32) {
    %c0_i32 = arith.constant 0 : i32
    return %arg0, %arg1 : i32, i32
  }
}

</mosaic_0001>

<llo_original>
// kernel: tpu_custom_call.1
$region0: #{tpu_custom_call.1}
  #allocation0 [shape = 'u32[]', space=smem, size = 0x4, offset = 0x4, fixed_abs, tag = 'smem constant byte address 0x4 - core index']
  #allocation1 [shape = 'u32[144,128]{1,0:T(1,128)}', space=vmem, size = 0x12000, scoped, tag = 'internal scratch']
  #allocation2 [shape = 'f32[256,128]{1,0:T(8,128)}', space=vmem, size = 0x20000, scoped, tag = 'scratch operand']
  %s0 = inlined_call_operand.vmem [shape: bf16[512,64], index: 0, kind: input, shape index: {}]
  %s1 = inlined_call_operand.vmem [shape: bf16[64,128], index: 1, kind: input, shape index: {}]
  %s2 = inlined_call_operand.vmem [shape: f32[1,128], index: 2, kind: input, shape index: {}]
  %s3 = inlined_call_operand.hbm [shape: f32[512,128], index: 3, kind: output, shape index: {}]
  %s4 = sld [smem:[#allocation0]]
  $region53: #{tpu_custom_call.1} parent=0
    _
  %s6 = ssub.s32 1, %s4
  %s7 = scalar_select 0, %s6, %s4
  $region1: #{tpu_custom_call.1} parent=0
    #allocation3 [shape = 'u8[262144]{0}', space=vmem, size = 0x40000, scoped, tag = 'output window, operand 0']
    #allocation4 [shape = 's32[2]{0}', space=sflag, size = 0x8, scoped, tag = 'scoped memory for tpu_custom_call.1']
    %8 = vsyncpa [#allocation4], 0
    %s9 = scalar_lea.sflag [#allocation4], 1
    %10 = vsyncpa %s9, 0
    loop: start=0, step=1, limit=4
    $region2: #{tpu_custom_call.1} parent=1 // loop_pre_header
      _
    $region3: #{tpu_custom_call.1} parent=1 // loop_header
      %s12 = sphi 0, %s16
      %p13 = scmp.ge.s32.totalorder %s12, 4
      %s19 = sphi 0, %s38
      %s20 = sphi 0, %s34
      %s21 = sphi 0, %s30
      %s22 = sphi 0, %s19
      %s23 = sphi 0, %s20
      %s24 = sphi 0, %s21
      %s25 = sphi 0, %s22
      %s26 = sphi 0, %s23
      %s27 = sphi 0, %s24
      %s43 = sphi 0, %s45
      %s46 = sphi 0, %s43
      %s47 = sphi 0, %s46
      %s63 = sphi 0, %s47
      %s71 = sphi 0, %s73
      %s74 = sphi 0, %s71
      %s75 = sphi 0, %s74
      %s91 = sphi 0, %s75
      %s97 = sphi 0, %s99
      %s100 = sphi 0, %s97
      %s101 = sphi 0, %s100
      %s117 = sphi 0, %s101
      %s125 = sphi 0, %s127
      %s128 = sphi 0, %s125
      %s129 = sphi 0, %s128
      %s145 = sphi 0, %s129
    $region4: #{tpu_custom_call.1} parent=1 // loop_header_branch
      %15 = sbr.rel (%p13) target = $region8
    $region5: #{tpu_custom_call.1} parent=1 // loop_body
      %s17 = ssub.s32 %s12, 1
      %s18 = ssub.s32 %s12, 2
      %s28 = sadd.s32 1, %s21
      %p29 = scmp.ge.s32.totalorder %s28, 1
      %s30 = scalar_select %p29, 0, %s28
      %s31 = sadd.s32 1, %s20
      %s32 = scalar_select %p29, %s31, %s20
      %p33 = scmp.ge.s32.totalorder %s32, 1
      %s34 = scalar_select %p33, 0, %s32
      %s35 = sadd.s32 1, %s19
      %s36 = scalar_select %p33, %s35, %s19
      %p37 = scmp.ge.s32.totalorder %s36, 2
      %s38 = scalar_select %p37, 0, %s36
      %s39 = ssub.s32 %s19, %s38
      %s40 = ssub.s32 %s21, %s30
      %s41 = sor.u32 %s39, %s40
      %p42 = scmp.eq.s32.totalorder %s41, 0
      %s44 = sadd.s32 %s43, 1
      %s45 = scalar_select %p42, %s43, %s44
      %p48 = pneg %p42
      %p49 = scmp.eq.s32.totalorder %s12, 1
      %p50 = por %p48, %p49
      %p51 = scmp.ne.s32.totalorder %s43, %s46
      %p52 = scmp.eq.s32.totalorder %s12, 0
      %p53 = por %p51, %p52
      %p54 = scmp.ne.s32.totalorder %s43, %s46
      %p55 = scmp.eq.s32.totalorder %s17, 1
      %p56 = por %p54, %p55
      %p57 = scmp.ne.s32.totalorder %s46, %s47
      %p58 = scmp.eq.s32.totalorder %s17, 0
      %p59 = por %p57, %p58
      %p60 = scmp.ne.s32.totalorder %s46, %s47
      %p61 = scmp.eq.s32.totalorder %s18, 1
      %p62 = por %p60, %p61
      %p64 = scmp.ne.s32.totalorder %s47, %s63
      %p65 = scmp.eq.s32.totalorder %s18, 0
      %p66 = por %p64, %p65
      %s67 = ssub.s32 %s21, %s30
      %s68 = ssub.s32 %s20, %s34
      %s69 = sor.u32 %s67, %s68
      %p70 = scmp.eq.s32.totalorder %s69, 0
      %s72 = sadd.s32 %s71, 1
      %s73 = scalar_select %p70, %s71, %s72
      %p76 = pneg %p70
      %p77 = scmp.eq.s32.totalorder %s12, 1
      %p78 = por %p76, %p77
      %p79 = scmp.ne.s32.totalorder %s71, %s74
      %p80 = scmp.eq.s32.totalorder %s12, 0
      %p81 = por %p79, %p80
      %p82 = scmp.ne.s32.totalorder %s71, %s74
      %p83 = scmp.eq.s32.totalorder %s17, 1
      %p84 = por %p82, %p83
      %p85 = scmp.ne.s32.totalorder %s74, %s75
      %p86 = scmp.eq.s32.totalorder %s17, 0
      %p87 = por %p85, %p86
      %p88 = scmp.ne.s32.totalorder %s74, %s75
      %p89 = scmp.eq.s32.totalorder %s18, 1
      %p90 = por %p88, %p89
      %p92 = scmp.ne.s32.totalorder %s75, %s91
      %p93 = scmp.eq.s32.totalorder %s18, 0
      %p94 = por %p92, %p93
      %s95 = ssub.s32 %s20, %s34
      %p96 = scmp.eq.s32.totalorder %s95, 0
      %s98 = sadd.s32 %s97, 1
      %s99 = scalar_select %p96, %s97, %s98
      %p102 = pneg %p96
      %p103 = scmp.eq.s32.totalorder %s12, 1
      %p104 = por %p102, %p103
      %p105 = scmp.ne.s32.totalorder %s97, %s100
      %p106 = scmp.eq.s32.totalorder %s12, 0
      %p107 = por %p105, %p106
      %p108 = scmp.ne.s32.totalorder %s97, %s100
      %p109 = scmp.eq.s32.totalorder %s17, 1
      %p110 = por %p108, %p109
      %p111 = scmp.ne.s32.totalorder %s100, %s101
      %p112 = scmp.eq.s32.totalorder %s17, 0
      %p113 = por %p111, %p112
      %p114 = scmp.ne.s32.totalorder %s100, %s101
      %p115 = scmp.eq.s32.totalorder %s18, 1
      %p116 = por %p114, %p115
      %p118 = scmp.ne.s32.totalorder %s101, %s117
      %p119 = scmp.eq.s32.totalorder %s18, 0
      %p120 = por %p118, %p119
      %s121 = ssub.s32 %s19, %s38
      %s122 = ssub.s32 %s20, %s34
      %s123 = sor.u32 %s121, %s122
      %p124 = scmp.eq.s32.totalorder %s123, 0
      %s126 = sadd.s32 %s125, 1
      %s127 = scalar_select %p124, %s125, %s126
      %p130 = pneg %p124
      %p131 = scmp.eq.s32.totalorder %s12, 1
      %p132 = por %p130, %p131
      %p133 = scmp.ne.s32.totalorder %s125, %s128
      %p134 = scmp.eq.s32.totalorder %s12, 0
      %p135 = por %p133, %p134
      %p136 = scmp.ne.s32.totalorder %s125, %s128
      %p137 = scmp.eq.s32.totalorder %s17, 1
      %p138 = por %p136, %p137
      %p139 = scmp.ne.s32.totalorder %s128, %s129
      %p140 = scmp.eq.s32.totalorder %s17, 0
      %p141 = por %p139, %p140
      %p142 = scmp.ne.s32.totalorder %s128, %s129
      %p143 = scmp.eq.s32.totalorder %s18, 1
      %p144 = por %p142, %p143
      %p146 = scmp.ne.s32.totalorder %s129, %s145
      %p147 = scmp.eq.s32.totalorder %s18, 0
      %p148 = por %p146, %p147
      %p149 = scmp.le.s32.totalorder 1, %s12
      %p150 = scmp.lt.s32.totalorder %s12, 3
      %p151 = pnand %p149, %p150
      %p152 = pneg %p151
      // Predicated region
      $region9: #{tpu_custom_call.1} parent=5 // pred_check
        _
      $region10: #{tpu_custom_call.1} parent=5 // pred_check_branch
        %154 = sbr.rel (%p151) target = $region12
      $region11: #{tpu_custom_call.1} parent=5 // pred_region
        %s155 = ssub.s32 %s12, 1
        // Predicated region
        $region13: #{tpu_custom_call.1} parent=11 // pred_check
          %p156 = pneg %p87
        $region14: #{tpu_custom_call.1} parent=11 // pred_check_branch
          %158 = sbr.rel (%p156) target = $region16
        $region15: #{tpu_custom_call.1} parent=11 // pred_region
          %s159 = smul.u32 8, %s24
          %p160 = scmp.lt.s32.totalorder %s159, 7
          %s161 = scalar_select %p160, %s159, 7
          %p162 = scmp.lt.s32.totalorder %s23, 0
          %s163 = scalar_select %p162, %s23, 0
          %s164 = sadd.s32 %s163, %s161
          %s165 = smul.addr %s164, 4
          %s166 = scalar_lea.vmem %s1, %s165
          %s167 = smul.u32 8, %s24
        $region16: #{tpu_custom_call.1} parent=11 // pred_fallthru
          _
        // Predicated region
        $region17: #{tpu_custom_call.1} parent=11 // pred_check
          %p168 = pneg %p113
        $region18: #{tpu_custom_call.1} parent=11 // pred_check_branch
          %170 = sbr.rel (%p168) target = $region20
        $region19: #{tpu_custom_call.1} parent=11 // pred_region
          %p171 = scmp.lt.s32.totalorder %s23, 0
          %s172 = scalar_select %p171, %s23, 0
          %s173 = scalar_lea.vmem %s2, %s172
        $region20: #{tpu_custom_call.1} parent=11 // pred_fallthru
          _
      $region12: #{tpu_custom_call.1} parent=5 // pred_fallthru
        _
      %p174 = scmp.lt.s32.totalorder %s12, 2
      // Predicated region
      $region21: #{tpu_custom_call.1} parent=5 // pred_check
        %p175 = pneg %p174
      $region22: #{tpu_custom_call.1} parent=5 // pred_check_branch
        %177 = sbr.rel (%p175) target = $region24
      $region23: #{tpu_custom_call.1} parent=5 // pred_region
        // Predicated region
        $region25: #{tpu_custom_call.1} parent=23 // pred_check
          %p178 = pneg %p53
        $region26: #{tpu_custom_call.1} parent=23 // pred_check_branch
          %180 = sbr.rel (%p178) target = $region28
        $region27: #{tpu_custom_call.1} parent=23 // pred_region
          %s181 = smul.u32 32, %s19
          %p182 = scmp.lt.s32.totalorder %s181, 63
          %s183 = scalar_select %p182, %s181, 63
          %p184 = scmp.lt.s32.totalorder %s21, 0
          %s185 = scalar_select %p184, %s21, 0
          %s186 = sadd.s32 %s185, %s183
          %s187 = smul.addr %s186, 4
          %s188 = scalar_lea.vmem %s0, %s187
          %s189 = smul.u32 32, %s19
        $region28: #{tpu_custom_call.1} parent=23 // pred_fallthru
          _
      $region24: #{tpu_custom_call.1} parent=5 // pred_fallthru
        _
      %p190 = scmp.le.s32.totalorder 1, %s12
      %p191 = scmp.lt.s32.totalorder %s12, 3
      %p192 = pnand %p190, %p191
      %p193 = pneg %p192
      // Predicated region
      $region29: #{tpu_custom_call.1} parent=5 // pred_check
        _
      $region30: #{tpu_custom_call.1} parent=5 // pred_check_branch
        %195 = sbr.rel (%p192) target = $region32
      $region31: #{tpu_custom_call.1} parent=5 // pred_region
        %s196 = ssub.s32 %s12, 1
        %s197 = smul.u32 32, %s22
        %p198 = scmp.lt.s32.totalorder %s197, 63
        %s199 = scalar_select %p198, %s197, 63
        %p200 = scmp.lt.s32.totalorder %s24, 0
        %s201 = scalar_select %p200, %s24, 0
        %s202 = sadd.s32 %s201, %s199
        %s203 = smul.addr %s202, 4
        %s204 = scalar_lea.vmem %s0, %s203
        %p205 = pneg %p59
        %p206 = pneg %p56
        %s207 = smul.u32 8, %s24
        %p208 = scmp.lt.s32.totalorder %s207, 7
        %s209 = scalar_select %p208, %s207, 7
        %p210 = scmp.lt.s32.totalorder %s23, 0
        %s211 = scalar_select %p210, %s23, 0
        %s212 = sadd.s32 %s211, %s209
        %s213 = smul.addr %s212, 4
        %s214 = scalar_lea.vmem %s1, %s213
        %p215 = pneg %p87
        %p216 = pneg %p84
        %p217 = scmp.lt.s32.totalorder %s23, 0
        %s218 = scalar_select %p217, %s23, 0
        %s219 = scalar_lea.vmem %s2, %s218
        %p220 = pneg %p113
        %p221 = pneg %p110
        %p222 = pneg %p141
        %p223 = pneg %p138
        %s224 = sand.u32 %s128, 1
        %s225 = scalar_lea.sflag [#allocation4], %s224
        %s226 = sand.u32 %s128, 1
        %s227 = smul.addr %s226, 256
        %s228 = scalar_lea.vmem [#allocation3], %s227
        %s229 = smul.u32 32, %s22
        %p230 = scmp.lt.s32.totalorder %s229, 63
        %s231 = scalar_select %p230, %s229, 63
        %p232 = scmp.lt.s32.totalorder %s24, 0
        %s233 = scalar_select %p232, %s24, 0
        %s234 = sadd.s32 %s233, %s231
        %s235 = smul.addr %s234, 4
        %s236 = scalar_lea.vmem %s0, %s235
        %s237 = smul.u32 32, %s22
        %s238 = smul.u32 8, %s24
        %p239 = scmp.lt.s32.totalorder %s238, 7
        %s240 = scalar_select %p239, %s238, 7
        %p241 = scmp.lt.s32.totalorder %s23, 0
        %s242 = scalar_select %p241, %s23, 0
        %s243 = sadd.s32 %s242, %s240
        %s244 = smul.addr %s243, 4
        %s245 = scalar_lea.vmem %s1, %s244
        %s246 = smul.u32 8, %s24
        %p247 = scmp.lt.s32.totalorder %s23, 0
        %s248 = scalar_select %p247, %s23, 0
        %s249 = scalar_lea.vmem %s2, %s248
        %s250 = smul.u32 32, %s22
        %p252 = scmp.eq.s32.totalorder %s24, 0
        // Predicated region
        $region33: #{tpu_custom_call.1} parent=31 // pred_check
          %p253 = pneg %p252
        $region34: #{tpu_custom_call.1} parent=31 // pred_check_branch
          %255 = sbr.rel (%p253) target = $region36
        $region35: #{tpu_custom_call.1} parent=31 // pred_region
          %256 = vst [vmem:[#allocation2] sm:$0xff] 0.0
          %257 = vst [vmem:[#allocation2 + $0x8] sm:$0xff] 0.0
          %258 = vst [vmem:[#allocation2 + $0x10] sm:$0xff] 0.0
          %259 = vst [vmem:[#allocation2 + $0x18] sm:$0xff] 0.0
          %260 = vst [vmem:[#allocation2 + $0x20] sm:$0xff] 0.0
          %261 = vst [vmem:[#allocation2 + $0x28] sm:$0xff] 0.0
          %262 = vst [vmem:[#allocation2 + $0x30] sm:$0xff] 0.0
          %263 = vst [vmem:[#allocation2 + $0x38] sm:$0xff] 0.0
          %264 = vst [vmem:[#allocation2 + $0x40] sm:$0xff] 0.0
          %265 = vst [vmem:[#allocation2 + $0x48] sm:$0xff] 0.0
          %266 = vst [vmem:[#allocation2 + $0x50] sm:$0xff] 0.0
          %267 = vst [vmem:[#allocation2 + $0x58] sm:$0xff] 0.0
          %268 = vst [vmem:[#allocation2 + $0x60] sm:$0xff] 0.0
          %269 = vst [vmem:[#allocation2 + $0x68] sm:$0xff] 0.0
          %270 = vst [vmem:[#allocation2 + $0x70] sm:$0xff] 0.0
          %271 = vst [vmem:[#allocation2 + $0x78] sm:$0xff] 0.0
          %272 = vst [vmem:[#allocation2 + $0x80] sm:$0xff] 0.0
          %273 = vst [vmem:[#allocation2 + $0x88] sm:$0xff] 0.0
          %274 = vst [vmem:[#allocation2 + $0x90] sm:$0xff] 0.0
          %275 = vst [vmem:[#allocation2 + $0x98] sm:$0xff] 0.0
          %276 = vst [vmem:[#allocation2 + $0xa0] sm:$0xff] 0.0
          %277 = vst [vmem:[#allocation2 + $0xa8] sm:$0xff] 0.0
          %278 = vst [vmem:[#allocation2 + $0xb0] sm:$0xff] 0.0
          %279 = vst [vmem:[#allocation2 + $0xb8] sm:$0xff] 0.0
          %280 = vst [vmem:[#allocation2 + $0xc0] sm:$0xff] 0.0
          %281 = vst [vmem:[#allocation2 + $0xc8] sm:$0xff] 0.0
          %282 = vst [vmem:[#allocation2 + $0xd0] sm:$0xff] 0.0
          %283 = vst [vmem:[#allocation2 + $0xd8] sm:$0xff] 0.0
          %284 = vst [vmem:[#allocation2 + $0xe0] sm:$0xff] 0.0
          %285 = vst [vmem:[#allocation2 + $0xe8] sm:$0xff] 0.0
          %286 = vst [vmem:[#allocation2 + $0xf0] sm:$0xff] 0.0
          %287 = vst [vmem:[#allocation2 + $0xf8] sm:$0xff] 0.0
        $region36: #{tpu_custom_call.1} parent=31 // pred_fallthru
          _
        %v288 = vld [vmem:[#allocation2] sm:$0xff]
        %v289 = vld [vmem:[#allocation2 + $0x8] sm:$0xff]
        %v290 = vld [vmem:[#allocation2 + $0x10] sm:$0xff]
        %v291 = vld [vmem:[#allocation2 + $0x18] sm:$0xff]
        %v292 = vld [vmem:[#allocation2 + $0x20] sm:$0xff]
        %v293 = vld [vmem:[#allocation2 + $0x28] sm:$0xff]
        %v294 = vld [vmem:[#allocation2 + $0x30] sm:$0xff]
        %v295 = vld [vmem:[#allocation2 + $0x38] sm:$0xff]
        %v296 = vld [vmem:[#allocation2 + $0x40] sm:$0xff]
        %v297 = vld [vmem:[#allocation2 + $0x48] sm:$0xff]
        %v298 = vld [vmem:[#allocation2 + $0x50] sm:$0xff]
        %v299 = vld [vmem:[#allocation2 + $0x58] sm:$0xff]
        %v300 = vld [vmem:[#allocation2 + $0x60] sm:$0xff]
        %v301 = vld [vmem:[#allocation2 + $0x68] sm:$0xff]
        %v302 = vld [vmem:[#allocation2 + $0x70] sm:$0xff]
        %v303 = vld [vmem:[#allocation2 + $0x78] sm:$0xff]
        %v304 = vld [vmem:[#allocation2 + $0x80] sm:$0xff]
        %v305 = vld [vmem:[#allocation2 + $0x88] sm:$0xff]
        %v306 = vld [vmem:[#allocation2 + $0x90] sm:$0xff]
        %v307 = vld [vmem:[#allocation2 + $0x98] sm:$0xff]
        %v308 = vld [vmem:[#allocation2 + $0xa0] sm:$0xff]
        %v309 = vld [vmem:[#allocation2 + $0xa8] sm:$0xff]
        %v310 = vld [vmem:[#allocation2 + $0xb0] sm:$0xff]
        %v311 = vld [vmem:[#allocation2 + $0xb8] sm:$0xff]
        %v312 = vld [vmem:[#allocation2 + $0xc0] sm:$0xff]
        %v313 = vld [vmem:[#allocation2 + $0xc8] sm:$0xff]
        %v314 = vld [vmem:[#allocation2 + $0xd0] sm:$0xff]
        %v315 = vld [vmem:[#allocation2 + $0xd8] sm:$0xff]
        %v316 = vld [vmem:[#allocation2 + $0xe0] sm:$0xff]
        %v317 = vld [vmem:[#allocation2 + $0xe8] sm:$0xff]
        %v318 = vld [vmem:[#allocation2 + $0xf0] sm:$0xff]
        %v319 = vld [vmem:[#allocation2 + $0xf8] sm:$0xff]
        %v320 = vld [vmem:[%s236] sm:$0xf]
        %v321 = vld [vmem:[%s236 + $0x4] sm:$0xf]
        %v322 = vld [vmem:[%s236 + $0x8] sm:$0xf]
        %v323 = vld [vmem:[%s236 + $0xc] sm:$0xf]
        %v324 = vld [vmem:[%s236 + $0x10] sm:$0xf]
        %v325 = vld [vmem:[%s236 + $0x14] sm:$0xf]
        %v326 = vld [vmem:[%s236 + $0x18] sm:$0xf]
        %v327 = vld [vmem:[%s236 + $0x1c] sm:$0xf]
        %v328 = vld [vmem:[%s236 + $0x20] sm:$0xf]
        %v329 = vld [vmem:[%s236 + $0x24] sm:$0xf]
        %v330 = vld [vmem:[%s236 + $0x28] sm:$0xf]
        %v331 = vld [vmem:[%s236 + $0x2c] sm:$0xf]
        %v332 = vld [vmem:[%s236 + $0x30] sm:$0xf]
        %v333 = vld [vmem:[%s236 + $0x34] sm:$0xf]
        %v334 = vld [vmem:[%s236 + $0x38] sm:$0xf]
        %v335 = vld [vmem:[%s236 + $0x3c] sm:$0xf]
        %v336 = vld [vmem:[%s236 + $0x40] sm:$0xf]
        %v337 = vld [vmem:[%s236 + $0x44] sm:$0xf]
        %v338 = vld [vmem:[%s236 + $0x48] sm:$0xf]
        %v339 = vld [vmem:[%s236 + $0x4c] sm:$0xf]
        %v340 = vld [vmem:[%s236 + $0x50] sm:$0xf]
        %v341 = vld [vmem:[%s236 + $0x54] sm:$0xf]
        %v342 = vld [vmem:[%s236 + $0x58] sm:$0xf]
        %v343 = vld [vmem:[%s236 + $0x5c] sm:$0xf]
        %v344 = vld [vmem:[%s236 + $0x60] sm:$0xf]
        %v345 = vld [vmem:[%s236 + $0x64] sm:$0xf]
        %v346 = vld [vmem:[%s236 + $0x68] sm:$0xf]
        %v347 = vld [vmem:[%s236 + $0x6c] sm:$0xf]
        %v348 = vld [vmem:[%s236 + $0x70] sm:$0xf]
        %v349 = vld [vmem:[%s236 + $0x74] sm:$0xf]
        %v350 = vld [vmem:[%s236 + $0x78] sm:$0xf]
        %v351 = vld [vmem:[%s236 + $0x7c] sm:$0xf]
        %v352 = vld [vmem:[%s245] sm:$0xf]
        %v353 = vld [vmem:[%s245 + $0x4] sm:$0xf]
        %v354 = vld [vmem:[%s245 + $0x8] sm:$0xf]
        %v355 = vld [vmem:[%s245 + $0xc] sm:$0xf]
        %v356 = vld [vmem:[%s245 + $0x10] sm:$0xf]
        %v357 = vld [vmem:[%s245 + $0x14] sm:$0xf]
        %v358 = vld [vmem:[%s245 + $0x18] sm:$0xf]
        %v359 = vld [vmem:[%s245 + $0x1c] sm:$0xf]
        %v392 = vunpack.c.l.b16 %v320
        %v393 = vunpack.c.l.b16 %v321
        %v394 = vunpack.c.l.b16 %v322
        %v395 = vunpack.c.l.b16 %v323
        %v396 = vunpack.c.l.b16 %v324
        %v397 = vunpack.c.l.b16 %v325
        %v398 = vunpack.c.l.b16 %v326
        %v399 = vunpack.c.l.b16 %v327
        %v400 = vunpack.c.l.b16 %v328
        %v401 = vunpack.c.l.b16 %v329
        %v402 = vunpack.c.l.b16 %v330
        %v403 = vunpack.c.l.b16 %v331
        %v404 = vunpack.c.l.b16 %v332
        %v405 = vunpack.c.l.b16 %v333
        %v406 = vunpack.c.l.b16 %v334
        %v407 = vunpack.c.l.b16 %v335
        %v408 = vunpack.c.l.b16 %v336
        %v409 = vunpack.c.l.b16 %v337
        %v410 = vunpack.c.l.b16 %v338
        %v411 = vunpack.c.l.b16 %v339
        %v412 = vunpack.c.l.b16 %v340
        %v413 = vunpack.c.l.b16 %v341
        %v414 = vunpack.c.l.b16 %v342
        %v415 = vunpack.c.l.b16 %v343
        %v416 = vunpack.c.l.b16 %v344
        %v417 = vunpack.c.l.b16 %v345
        %v418 = vunpack.c.l.b16 %v346
        %v419 = vunpack.c.l.b16 %v347
        %v420 = vunpack.c.l.b16 %v348
        %v421 = vunpack.c.l.b16 %v349
        %v422 = vunpack.c.l.b16 %v350
        %v423 = vunpack.c.l.b16 %v351
        %v424 = vpack.c.b16 %v393, %v392
        %v425 = vpack.c.b16 %v395, %v394
        %v426 = vpack.c.b16 %v397, %v396
        %v427 = vpack.c.b16 %v399, %v398
        %v428 = vpack.c.b16 %v401, %v400
        %v429 = vpack.c.b16 %v403, %v402
        %v430 = vpack.c.b16 %v405, %v404
        %v431 = vpack.c.b16 %v407, %v406
        %v432 = vpack.c.b16 %v409, %v408
        %v433 = vpack.c.b16 %v411, %v410
        %v434 = vpack.c.b16 %v413, %v412
        %v435 = vpack.c.b16 %v415, %v414
        %v436 = vpack.c.b16 %v417, %v416
        %v437 = vpack.c.b16 %v419, %v418
        %v438 = vpack.c.b16 %v421, %v420
        %v439 = vpack.c.b16 %v423, %v422
        %v448 = vunpack.c.l.b16 %v352
        %v449 = vunpack.c.l.b16 %v353
        %v450 = vunpack.c.l.b16 %v354
        %v451 = vunpack.c.l.b16 %v355
        %v452 = vunpack.c.l.b16 %v356
        %v453 = vunpack.c.l.b16 %v357
        %v454 = vunpack.c.l.b16 %v358
        %v455 = vunpack.c.l.b16 %v359
        %v456 = vpack.c.b16 %v449, %v448
        %v457 = vpack.c.b16 %v451, %v450
        %v458 = vpack.c.b16 %v453, %v452
        %v459 = vpack.c.b16 %v455, %v454
        %vm464 = vcmask 523264
        %v466 = vsel %vm464, %v424, 0
        %v469 = vsel %vm464, %v425, 0
        %v472 = vsel %vm464, %v426, 0
        %v475 = vsel %vm464, %v427, 0
        %v478 = vsel %vm464, %v428, 0
        %v481 = vsel %vm464, %v429, 0
        %v484 = vsel %vm464, %v430, 0
        %v487 = vsel %vm464, %v431, 0
        %v490 = vsel %vm464, %v432, 0
        %v493 = vsel %vm464, %v433, 0
        %v496 = vsel %vm464, %v434, 0
        %v499 = vsel %vm464, %v435, 0
        %v502 = vsel %vm464, %v436, 0
        %v505 = vsel %vm464, %v437, 0
        %v508 = vsel %vm464, %v438, 0
        %v511 = vsel %vm464, %v439, 0
        %513 = vmatprep.subr.bf16.mxu0 0
        %514 = vmatpush1.bf16.msra.mxu0 0
        %515 = vmatprep.subr.bf16.mxu0 0
        %516 = vmatpush1.bf16.msra.mxu0 0
        %517 = vmatprep.subr.bf16.mxu0 0
        %518 = vmatpush1.bf16.msra.mxu0 0
        %519 = vmatprep.subr.bf16.mxu0 0
        %520 = vmatpush1.bf16.msra.mxu0 0
        %521 = vmatprep.subr.bf16.mxu0 0
        %522 = vmatpush1.bf16.msra.mxu0 %v459
        %523 = vmatprep.subr.bf16.mxu0 0
        %524 = vmatpush1.bf16.msra.mxu0 %v458
        %525 = vmatprep.subr.bf16.mxu0 0
        %526 = vmatpush1.bf16.msra.mxu0 %v457
        %527 = vmatprep.subr.bf16.mxu0 0
        %528 = vmatpush1.bf16.msra.mxu0 %v456
        %529 = vmatprep.subr.bf16.mxu0 0
        %530 = vmatpush2.bf16.msra.mxu0 0
        %531 = vmatprep.subr.bf16.mxu0 0
        %532 = vmatpush2.bf16.msra.mxu0 0
        %533 = vmatprep.subr.bf16.mxu0 0
        %534 = vmatpush2.bf16.msra.mxu0 0
        %535 = vmatprep.subr.bf16.mxu0 0
        %536 = vmatpush2.bf16.msra.mxu0 0
        %537 = vmatprep.subr.bf16.mxu0 0
        %538 = vmatpush2.bf16.msra.mxu0 0
        %539 = vmatprep.subr.bf16.mxu0 0
        %540 = vmatpush2.bf16.msra.mxu0 0
        %541 = vmatprep.subr.bf16.mxu0 0
        %542 = vmatpush2.bf16.msra.mxu0 0
        %543 = vmatprep.subr.bf16.mxu0 0
        %544 = vmatpush2.bf16.msra.mxu0 0
        %545 = vmatprep.mubr.bf16.mxu0 0
        %546 = vmatmul.mubr.bf16.gmra.mxu0 %v466
        %v547 = vpop.f32.mrf.mxu0
        %v548 = vadd.f32 0.0, %v547
        %v549 = vpop.f32.mrf.mxu0
        %v550 = vpop.f32.mrf.mxu0
        %v551 = vadd.f32 0.0, %v550
        %v552 = vpop.f32.mrf.mxu0
        %553 = vmatprep.mubr.bf16.mxu0 0
        %554 = vmatmul.mubr.bf16.gmra.mxu0 %v469
        %v555 = vpop.f32.mrf.mxu0
        %v556 = vadd.f32 0.0, %v555
        %v557 = vpop.f32.mrf.mxu0
        %v558 = vpop.f32.mrf.mxu0
        %v559 = vadd.f32 0.0, %v558
        %v560 = vpop.f32.mrf.mxu0
        %561 = vmatprep.mubr.bf16.mxu0 0
        %562 = vmatmul.mubr.bf16.gmra.mxu0 %v472
        %v563 = vpop.f32.mrf.mxu0
        %v564 = vadd.f32 0.0, %v563
        %v565 = vpop.f32.mrf.mxu0
        %v566 = vpop.f32.mrf.mxu0
        %v567 = vadd.f32 0.0, %v566
        %v568 = vpop.f32.mrf.mxu0
        %569 = vmatprep.mubr.bf16.mxu0 0
        %570 = vmatmul.mubr.bf16.gmra.mxu0 %v475
        %v571 = vpop.f32.mrf.mxu0
        %v572 = vadd.f32 0.0, %v571
        %v573 = vpop.f32.mrf.mxu0
        %v574 = vpop.f32.mrf.mxu0
        %v575 = vadd.f32 0.0, %v574
        %v576 = vpop.f32.mrf.mxu0
        %577 = vmatprep.mubr.bf16.mxu0 0
        %578 = vmatmul.mubr.bf16.gmra.mxu0 %v478
        %v579 = vpop.f32.mrf.mxu0
        %v580 = vadd.f32 0.0, %v579
        %v581 = vpop.f32.mrf.mxu0
        %v582 = vpop.f32.mrf.mxu0
        %v583 = vadd.f32 0.0, %v582
        %v584 = vpop.f32.mrf.mxu0
        %585 = vmatprep.mubr.bf16.mxu0 0
        %586 = vmatmul.mubr.bf16.gmra.mxu0 %v481
        %v587 = vpop.f32.mrf.mxu0
        %v588 = vadd.f32 0.0, %v587
        %v589 = vpop.f32.mrf.mxu0
        %v590 = vpop.f32.mrf.mxu0
        %v591 = vadd.f32 0.0, %v590
        %v592 = vpop.f32.mrf.mxu0
        %593 = vmatprep.mubr.bf16.mxu0 0
        %594 = vmatmul.mubr.bf16.gmra.mxu0 %v484
        %v595 = vpop.f32.mrf.mxu0
        %v596 = vadd.f32 0.0, %v595
        %v597 = vpop.f32.mrf.mxu0
        %v598 = vpop.f32.mrf.mxu0
        %v599 = vadd.f32 0.0, %v598
        %v600 = vpop.f32.mrf.mxu0
        %601 = vmatprep.mubr.bf16.mxu0 0
        %602 = vmatmul.mubr.bf16.gmra.mxu0 %v487
        %v603 = vpop.f32.mrf.mxu0
        %v604 = vadd.f32 0.0, %v603
        %v605 = vpop.f32.mrf.mxu0
        %v606 = vpop.f32.mrf.mxu0
        %v607 = vadd.f32 0.0, %v606
        %v608 = vpop.f32.mrf.mxu0
        %609 = vmatprep.mubr.bf16.mxu0 0
        %610 = vmatmul.mubr.bf16.gmra.mxu0 %v490
        %v611 = vpop.f32.mrf.mxu0
        %v612 = vadd.f32 0.0, %v611
        %v613 = vpop.f32.mrf.mxu0
        %v614 = vpop.f32.mrf.mxu0
        %v615 = vadd.f32 0.0, %v614
        %v616 = vpop.f32.mrf.mxu0
        %617 = vmatprep.mubr.bf16.mxu0 0
        %618 = vmatmul.mubr.bf16.gmra.mxu0 %v493
        %v619 = vpop.f32.mrf.mxu0
        %v620 = vadd.f32 0.0, %v619
        %v621 = vpop.f32.mrf.mxu0
        %v622 = vpop.f32.mrf.mxu0
        %v623 = vadd.f32 0.0, %v622
        %v624 = vpop.f32.mrf.mxu0
        %625 = vmatprep.mubr.bf16.mxu0 0
        %626 = vmatmul.mubr.bf16.gmra.mxu0 %v496
        %v627 = vpop.f32.mrf.mxu0
        %v628 = vadd.f32 0.0, %v627
        %v629 = vpop.f32.mrf.mxu0
        %v630 = vpop.f32.mrf.mxu0
        %v631 = vadd.f32 0.0, %v630
        %v632 = vpop.f32.mrf.mxu0
        %633 = vmatprep.mubr.bf16.mxu0 0
        %634 = vmatmul.mubr.bf16.gmra.mxu0 %v499
        %v635 = vpop.f32.mrf.mxu0
        %v636 = vadd.f32 0.0, %v635
        %v637 = vpop.f32.mrf.mxu0
        %v638 = vpop.f32.mrf.mxu0
        %v639 = vadd.f32 0.0, %v638
        %v640 = vpop.f32.mrf.mxu0
        %641 = vmatprep.mubr.bf16.mxu0 0
        %642 = vmatmul.mubr.bf16.gmra.mxu0 %v502
        %v643 = vpop.f32.mrf.mxu0
        %v644 = vadd.f32 0.0, %v643
        %v645 = vpop.f32.mrf.mxu0
        %v646 = vpop.f32.mrf.mxu0
        %v647 = vadd.f32 0.0, %v646
        %v648 = vpop.f32.mrf.mxu0
        %649 = vmatprep.mubr.bf16.mxu0 0
        %650 = vmatmul.mubr.bf16.gmra.mxu0 %v505
        %v651 = vpop.f32.mrf.mxu0
        %v652 = vadd.f32 0.0, %v651
        %v653 = vpop.f32.mrf.mxu0
        %v654 = vpop.f32.mrf.mxu0
        %v655 = vadd.f32 0.0, %v654
        %v656 = vpop.f32.mrf.mxu0
        %657 = vmatprep.mubr.bf16.mxu0 0
        %658 = vmatmul.mubr.bf16.gmra.mxu0 %v508
        %v659 = vpop.f32.mrf.mxu0
        %v660 = vadd.f32 0.0, %v659
        %v661 = vpop.f32.mrf.mxu0
        %v662 = vpop.f32.mrf.mxu0
        %v663 = vadd.f32 0.0, %v662
        %v664 = vpop.f32.mrf.mxu0
        %665 = vmatprep.mubr.bf16.mxu0 0
        %666 = vmatmul.mubr.bf16.gmra.mxu0 %v511
        %v667 = vpop.f32.mrf.mxu0
        %v668 = vadd.f32 0.0, %v667
        %v669 = vpop.f32.mrf.mxu0
        %v670 = vpop.f32.mrf.mxu0
        %v671 = vadd.f32 0.0, %v670
        %v672 = vpop.f32.mrf.mxu0
        %673 = vdwg.mxu0
        %v674 = vadd.f32 %v288, %v548
        %v675 = vadd.f32 %v289, %v551
        %v676 = vadd.f32 %v290, %v556
        %v677 = vadd.f32 %v291, %v559
        %v678 = vadd.f32 %v292, %v564
        %v679 = vadd.f32 %v293, %v567
        %v680 = vadd.f32 %v294, %v572
        %v681 = vadd.f32 %v295, %v575
        %v682 = vadd.f32 %v296, %v580
        %v683 = vadd.f32 %v297, %v583
        %v684 = vadd.f32 %v298, %v588
        %v685 = vadd.f32 %v299, %v591
        %v686 = vadd.f32 %v300, %v596
        %v687 = vadd.f32 %v301, %v599
        %v688 = vadd.f32 %v302, %v604
        %v689 = vadd.f32 %v303, %v607
        %v690 = vadd.f32 %v304, %v612
        %v691 = vadd.f32 %v305, %v615
        %v692 = vadd.f32 %v306, %v620
        %v693 = vadd.f32 %v307, %v623
        %v694 = vadd.f32 %v308, %v628
        %v695 = vadd.f32 %v309, %v631
        %v696 = vadd.f32 %v310, %v636
        %v697 = vadd.f32 %v311, %v639
        %v698 = vadd.f32 %v312, %v644
        %v699 = vadd.f32 %v313, %v647
        %v700 = vadd.f32 %v314, %v652
        %v701 = vadd.f32 %v315, %v655
        %v702 = vadd.f32 %v316, %v660
        %v703 = vadd.f32 %v317, %v663
        %v704 = vadd.f32 %v318, %v668
        %v705 = vadd.f32 %v319, %v671
        %706 = vst [vmem:[#allocation2] sm:$0xff] %v674
        %707 = vst [vmem:[#allocation2 + $0x8] sm:$0xff] %v675
        %708 = vst [vmem:[#allocation2 + $0x10] sm:$0xff] %v676
        %709 = vst [vmem:[#allocation2 + $0x18] sm:$0xff] %v677
        %710 = vst [vmem:[#allocation2 + $0x20] sm:$0xff] %v678
        %711 = vst [vmem:[#allocation2 + $0x28] sm:$0xff] %v679
        %712 = vst [vmem:[#allocation2 + $0x30] sm:$0xff] %v680
        %713 = vst [vmem:[#allocation2 + $0x38] sm:$0xff] %v681
        %714 = vst [vmem:[#allocation2 + $0x40] sm:$0xff] %v682
        %715 = vst [vmem:[#allocation2 + $0x48] sm:$0xff] %v683
        %716 = vst [vmem:[#allocation2 + $0x50] sm:$0xff] %v684
        %717 = vst [vmem:[#allocation2 + $0x58] sm:$0xff] %v685
        %718 = vst [vmem:[#allocation2 + $0x60] sm:$0xff] %v686
        %719 = vst [vmem:[#allocation2 + $0x68] sm:$0xff] %v687
        %720 = vst [vmem:[#allocation2 + $0x70] sm:$0xff] %v688
        %721 = vst [vmem:[#allocation2 + $0x78] sm:$0xff] %v689
        %722 = vst [vmem:[#allocation2 + $0x80] sm:$0xff] %v690
        %723 = vst [vmem:[#allocation2 + $0x88] sm:$0xff] %v691
        %724 = vst [vmem:[#allocation2 + $0x90] sm:$0xff] %v692
        %725 = vst [vmem:[#allocation2 + $0x98] sm:$0xff] %v693
        %726 = vst [vmem:[#allocation2 + $0xa0] sm:$0xff] %v694
        %727 = vst [vmem:[#allocation2 + $0xa8] sm:$0xff] %v695
        %728 = vst [vmem:[#allocation2 + $0xb0] sm:$0xff] %v696
        %729 = vst [vmem:[#allocation2 + $0xb8] sm:$0xff] %v697
        %730 = vst [vmem:[#allocation2 + $0xc0] sm:$0xff] %v698
        %731 = vst [vmem:[#allocation2 + $0xc8] sm:$0xff] %v699
        %732 = vst [vmem:[#allocation2 + $0xd0] sm:$0xff] %v700
        %733 = vst [vmem:[#allocation2 + $0xd8] sm:$0xff] %v701
        %734 = vst [vmem:[#allocation2 + $0xe0] sm:$0xff] %v702
        %735 = vst [vmem:[#allocation2 + $0xe8] sm:$0xff] %v703
        %736 = vst [vmem:[#allocation2 + $0xf0] sm:$0xff] %v704
        %737 = vst [vmem:[#allocation2 + $0xf8] sm:$0xff] %v705
        // Predicated region
        $region37: #{tpu_custom_call.1} parent=31 // pred_check
          %p738 = pneg %p252
        $region38: #{tpu_custom_call.1} parent=31 // pred_check_branch
          %740 = sbr.rel (%p738) target = $region40
        $region39: #{tpu_custom_call.1} parent=31 // pred_region
          %v741 = vld [vmem:[#allocation2] sm:$0xff]
          %v742 = vld [vmem:[#allocation2 + $0x8] sm:$0xff]
          %v743 = vld [vmem:[#allocation2 + $0x10] sm:$0xff]
          %v744 = vld [vmem:[#allocation2 + $0x18] sm:$0xff]
          %v745 = vld [vmem:[#allocation2 + $0x20] sm:$0xff]
          %v746 = vld [vmem:[#allocation2 + $0x28] sm:$0xff]
          %v747 = vld [vmem:[#allocation2 + $0x30] sm:$0xff]
          %v748 = vld [vmem:[#allocation2 + $0x38] sm:$0xff]
          %v749 = vld [vmem:[#allocation2 + $0x40] sm:$0xff]
          %v750 = vld [vmem:[#allocation2 + $0x48] sm:$0xff]
          %v751 = vld [vmem:[#allocation2 + $0x50] sm:$0xff]
          %v752 = vld [vmem:[#allocation2 + $0x58] sm:$0xff]
          %v753 = vld [vmem:[#allocation2 + $0x60] sm:$0xff]
          %v754 = vld [vmem:[#allocation2 + $0x68] sm:$0xff]
          %v755 = vld [vmem:[#allocation2 + $0x70] sm:$0xff]
          %v756 = vld [vmem:[#allocation2 + $0x78] sm:$0xff]
          %v757 = vld [vmem:[#allocation2 + $0x80] sm:$0xff]
          %v758 = vld [vmem:[#allocation2 + $0x88] sm:$0xff]
          %v759 = vld [vmem:[#allocation2 + $0x90] sm:$0xff]
          %v760 = vld [vmem:[#allocation2 + $0x98] sm:$0xff]
          %v761 = vld [vmem:[#allocation2 + $0xa0] sm:$0xff]
          %v762 = vld [vmem:[#allocation2 + $0xa8] sm:$0xff]
          %v763 = vld [vmem:[#allocation2 + $0xb0] sm:$0xff]
          %v764 = vld [vmem:[#allocation2 + $0xb8] sm:$0xff]
          %v765 = vld [vmem:[#allocation2 + $0xc0] sm:$0xff]
          %v766 = vld [vmem:[#allocation2 + $0xc8] sm:$0xff]
          %v767 = vld [vmem:[#allocation2 + $0xd0] sm:$0xff]
          %v768 = vld [vmem:[#allocation2 + $0xd8] sm:$0xff]
          %v769 = vld [vmem:[#allocation2 + $0xe0] sm:$0xff]
          %v770 = vld [vmem:[#allocation2 + $0xe8] sm:$0xff]
          %v771 = vld [vmem:[#allocation2 + $0xf0] sm:$0xff]
          %v772 = vld [vmem:[#allocation2 + $0xf8] sm:$0xff]
          %v773 = vld [vmem:[%s249] sm:$0x1]
          %v775 = vlaneseq
          %v776 = vshrl.u32 %v775, 7
          %v777 = vsub.s32 0, %v776
          %v778 = vrot.slane %v773, %v777
          %v780 = vadd.f32 %v741, %v778
          %v781 = vadd.f32 %v742, %v778
          %v782 = vadd.f32 %v743, %v778
          %v783 = vadd.f32 %v744, %v778
          %v784 = vadd.f32 %v745, %v778
          %v785 = vadd.f32 %v746, %v778
          %v786 = vadd.f32 %v747, %v778
          %v787 = vadd.f32 %v748, %v778
          %v788 = vadd.f32 %v749, %v778
          %v789 = vadd.f32 %v750, %v778
          %v790 = vadd.f32 %v751, %v778
          %v791 = vadd.f32 %v752, %v778
          %v792 = vadd.f32 %v753, %v778
          %v793 = vadd.f32 %v754, %v778
          %v794 = vadd.f32 %v755, %v778
          %v795 = vadd.f32 %v756, %v778
          %v796 = vadd.f32 %v757, %v778
          %v797 = vadd.f32 %v758, %v778
          %v798 = vadd.f32 %v759, %v778
          %v799 = vadd.f32 %v760, %v778
          %v800 = vadd.f32 %v761, %v778
          %v801 = vadd.f32 %v762, %v778
          %v802 = vadd.f32 %v763, %v778
          %v803 = vadd.f32 %v764, %v778
          %v804 = vadd.f32 %v765, %v778
          %v805 = vadd.f32 %v766, %v778
          %v806 = vadd.f32 %v767, %v778
          %v807 = vadd.f32 %v768, %v778
          %v808 = vadd.f32 %v769, %v778
          %v809 = vadd.f32 %v770, %v778
          %v810 = vadd.f32 %v771, %v778
          %v811 = vadd.f32 %v772, %v778
          %812 = vst [vmem:[%s228] sm:$0xff] %v780
          %813 = vst [vmem:[%s228 + $0x8] sm:$0xff] %v781
          %814 = vst [vmem:[%s228 + $0x10] sm:$0xff] %v782
          %815 = vst [vmem:[%s228 + $0x18] sm:$0xff] %v783
          %816 = vst [vmem:[%s228 + $0x20] sm:$0xff] %v784
          %817 = vst [vmem:[%s228 + $0x28] sm:$0xff] %v785
          %818 = vst [vmem:[%s228 + $0x30] sm:$0xff] %v786
          %819 = vst [vmem:[%s228 + $0x38] sm:$0xff] %v787
          %820 = vst [vmem:[%s228 + $0x40] sm:$0xff] %v788
          %821 = vst [vmem:[%s228 + $0x48] sm:$0xff] %v789
          %822 = vst [vmem:[%s228 + $0x50] sm:$0xff] %v790
          %823 = vst [vmem:[%s228 + $0x58] sm:$0xff] %v791
          %824 = vst [vmem:[%s228 + $0x60] sm:$0xff] %v792
          %825 = vst [vmem:[%s228 + $0x68] sm:$0xff] %v793
          %826 = vst [vmem:[%s228 + $0x70] sm:$0xff] %v794
          %827 = vst [vmem:[%s228 + $0x78] sm:$0xff] %v795
          %828 = vst [vmem:[%s228 + $0x80] sm:$0xff] %v796
          %829 = vst [vmem:[%s228 + $0x88] sm:$0xff] %v797
          %830 = vst [vmem:[%s228 + $0x90] sm:$0xff] %v798
          %831 = vst [vmem:[%s228 + $0x98] sm:$0xff] %v799
          %832 = vst [vmem:[%s228 + $0xa0] sm:$0xff] %v800
          %833 = vst [vmem:[%s228 + $0xa8] sm:$0xff] %v801
          %834 = vst [vmem:[%s228 + $0xb0] sm:$0xff] %v802
          %835 = vst [vmem:[%s228 + $0xb8] sm:$0xff] %v803
          %836 = vst [vmem:[%s228 + $0xc0] sm:$0xff] %v804
          %837 = vst [vmem:[%s228 + $0xc8] sm:$0xff] %v805
          %838 = vst [vmem:[%s228 + $0xd0] sm:$0xff] %v806
          %839 = vst [vmem:[%s228 + $0xd8] sm:$0xff] %v807
          %840 = vst [vmem:[%s228 + $0xe0] sm:$0xff] %v808
          %841 = vst [vmem:[%s228 + $0xe8] sm:$0xff] %v809
          %842 = vst [vmem:[%s228 + $0xf0] sm:$0xff] %v810
          %843 = vst [vmem:[%s228 + $0xf8] sm:$0xff] %v811
        $region40: #{tpu_custom_call.1} parent=31 // pred_fallthru
          _
        %s844 = sand.u32 %s128, 1
        %s845 = scalar_lea.sflag [#allocation4], %s844
        %s846 = sand.u32 %s128, 1
        %s847 = smul.addr %s846, 256
        %s848 = scalar_lea.vmem [#allocation3], %s847
        // Predicated region
        $region41: #{tpu_custom_call.1} parent=31 // pred_check
          %p849 = pneg %p138
        $region42: #{tpu_custom_call.1} parent=31 // pred_check_branch
          %851 = sbr.rel (%p849) target = $region44
        $region43: #{tpu_custom_call.1} parent=31 // pred_region
          %s852 = smul.u32 32, %s22
          %s854 = ssub.s32 4096, 4096
          %855 = vsyncadd %s845, %s854
          %s856 = sadd.s32 %s23, %s852
          %s857 = smul.addr %s856, 128
          %s858 = scalar_lea.hbm %s3, %s857
          %s859 = sshll.u32 %s848, 4
          %s860 = int_to_ptr.vmem [resolvable:$true] %s859
          %865 = dma.vmem_to_hbm [thread:$0]  %s860, 4096, %s858, %s845, 128, 128, 8
        $region44: #{tpu_custom_call.1} parent=31 // pred_fallthru
          _
      $region32: #{tpu_custom_call.1} parent=5 // pred_fallthru
        _
      %p866 = scmp.le.s32.totalorder 2, %s12
      // Predicated region
      $region45: #{tpu_custom_call.1} parent=5 // pred_check
        %p867 = pneg %p866
      $region46: #{tpu_custom_call.1} parent=5 // pred_check_branch
        %869 = sbr.rel (%p867) target = $region48
      $region47: #{tpu_custom_call.1} parent=5 // pred_region
        %s870 = ssub.s32 %s12, 2
        // Predicated region
        $region49: #{tpu_custom_call.1} parent=47 // pred_check
          %p871 = pneg %p144
        $region50: #{tpu_custom_call.1} parent=47 // pred_check_branch
          %873 = sbr.rel (%p871) target = $region52
        $region51: #{tpu_custom_call.1} parent=47 // pred_region
          %s874 = sand.u32 %s129, 1
          %s875 = scalar_lea.sflag [#allocation4], %s874
          %s876 = sand.u32 %s129, 1
          %s877 = smul.addr %s876, 256
          %s878 = scalar_lea.vmem [#allocation3], %s877
          %879 = dma.done %s875, 4096
        $region52: #{tpu_custom_call.1} parent=47 // pred_fallthru
          _
      $region48: #{tpu_custom_call.1} parent=5 // pred_fallthru
        _
    $region6: #{tpu_custom_call.1} parent=1 // loop_footer
      %s16 = sadd.s32 1, %s12
    $region7: #{tpu_custom_call.1} parent=1 // loop_footer_branch
      %11 = sbr.rel target = $region3
    $region8: #{tpu_custom_call.1} parent=1 // loop_exit
      _
    %880 = vsyncpa [#allocation4], 1
    %s881 = scalar_lea.sflag [#allocation4], 1
    %882 = vsyncpa %s881, 1

</llo_original>
